<compile_context>
chip_gen: v6e
topology: v6e:2x2x1
jax: 0.10.0
libtpu: 0.0.40
codegen_flags: <defaults>
</compile_context>

<pallas_src>
import functools

import jax
import jax.numpy as jnp
from jax.experimental import pallas as pl
from jax.experimental.pallas import tpu as pltpu


def _round_up(x, m):
    return ((x + m - 1) // m) * m


def _encoder_kernel(y_ref, w1_ref, w2_ref, w3_ref, b_ref, out_ref):
    """Fused 3-layer MLP encoder for one batch tile.

    out_ref[:, :Z]          = mu
    out_ref[:, Z:2Z]        = 1e-6 + softplus(raw)
    out_ref[:, 2Z:two_z_p]  = padding lanes (discarded by the wrapper)
    written as a single lane-dense store.
    """
    H = w1_ref.shape[1]
    two_z_p = out_ref.shape[-1]          # padded to a multiple of 128
    z_dim = b_ref.shape[-1] and w3_ref.shape[1] // 2  # placeholder, replaced below
    wdt = w1_ref.dtype

    # z_dim is carried statically via the (unpadded) width encoded in b_ref row
    # layout: we simply recompute it from the out block and the closure below.
    # (Set properly by the wrapper through functools.partial.)
    raise NotImplementedError  # replaced by _make_kernel


def _make_kernel(z_dim):
    def kernel(y_ref, w1_ref, w2_ref, w3_ref, b_ref, out_ref):
        H = w1_ref.shape[1]
        two_z_p = out_ref.shape[-1]
        wdt = w1_ref.dtype

        x = y_ref[...].astype(wdt)                               # [TB, D]

        # Packed biases (f32): row 0 -> b1, row 1 -> b2, row 2 -> b3 (padded).
        b1 = b_ref[0:1, 0:H]                                     # [1, H]
        b2 = b_ref[1:2, 0:H]                                     # [1, H]
        b3 = b_ref[2:3, 0:two_z_p]                               # [1, 2Z_p]

        # Layer 1: MXU matmul (f32 accumulate), bias+ReLU in f32, cast once.
        h1 = jnp.dot(x, w1_ref[...], preferred_element_type=jnp.float32) + b1
        h1 = jnp.maximum(h1, 0.0).astype(wdt)                    # [TB, H]

        # Layer 2.
        h2 = jnp.dot(h1, w2_ref[...], preferred_element_type=jnp.float32) + b2
        h2 = jnp.maximum(h2, 0.0).astype(wdt)                    # [TB, H]

        # Layer 3 (output kept f32 for the epilogue).
        out = jnp.dot(h2, w3_ref[...], preferred_element_type=jnp.float32) + b3

        # Numerically stable softplus on the whole vreg (EUP ops), then a
        # per-lane select so the mu half passes through untouched. Padded
        # lanes (>= 2Z) are garbage-but-finite and discarded by the wrapper.
        sp = jnp.maximum(out, 0.0) + jnp.log1p(jnp.exp(-jnp.abs(out)))
        lane = jax.lax.broadcasted_iota(jnp.int32, out.shape, dimension=1)
        out_ref[...] = jnp.where(lane < z_dim, out, 1e-6 + sp).astype(out_ref.dtype)

    return kernel


def encoder_forward(Y, params, *, block_b=512):
    """Y: [B, data_dim] float32. params: dict of W1,b1,W2,b2,W3,b3 ([in,out] weights).

    Returns (mu, sigma), each [B, z_dim] float32.
    """
    W1, b1 = params["W1"], params["b1"]
    W2, b2 = params["W2"], params["b2"]
    W3, b3 = params["W3"], params["b3"]

    B, D = Y.shape
    H = W1.shape[1]
    two_z = W3.shape[1]
    z_dim = two_z // 2
    wdt = W1.dtype
    w_item = jnp.dtype(wdt).itemsize

    # ---- Pad the output feature dim to a lane-dense multiple of 128. ----
    two_z_p = _round_up(two_z, 128)
    if two_z_p != two_z:
        W3p = jnp.pad(W3, ((0, 0), (0, two_z_p - two_z)))
        b3p = jnp.pad(b3.reshape(-1), (0, two_z_p - two_z))
    else:
        W3p = W3
        b3p = b3.reshape(-1)

    # ---- Batch tiling (generation-aware). ----
    B8 = _round_up(B, 8)
    if B8 >= 512:
        # Large batch: TB is a multiple of 256 (MXU cadence on v6e/v7x) and we
        # guarantee >= 2 grid steps so "parallel" can shard over v7x's 2 TCs.
        half = max(256, (B8 // 2) // 256 * 256)
        TB = min(_round_up(max(block_b, 256), 256), half)
    else:
        # Small batch: single grid step; splitting only adds fixed per-step
        # overhead when nowhere near MXU saturation.
        TB = B8
    Bp = _round_up(B8, TB)
    Yp = Y if Bp == B else jnp.pad(Y, ((0, Bp - B), (0, 0)))

    # ---- Pack the three biases into one [3, maxW] f32 array. ----
    maxW = max(H, two_z_p)
    b_packed = jnp.zeros((3, maxW), jnp.float32)
    b_packed = b_packed.at[0, :H].set(b1.reshape(-1).astype(jnp.float32))
    b_packed = b_packed.at[1, :H].set(b2.reshape(-1).astype(jnp.float32))
    b_packed = b_packed.at[2, :two_z_p].set(b3p.astype(jnp.float32))

    grid = (Bp // TB,)

    # ---- VMEM budget (weights resident + double-buffered I/O + f32 acts). ----
    w_bytes = (W1.size + W2.size + W3p.size) * w_item
    bias_bytes = b_packed.size * 4
    io_bytes = 2 * TB * (D * Yp.dtype.itemsize + two_z_p * 4)      # double-buffered
    act_bytes = 3 * TB * H * 4                                      # h1/h2 (f32 + cast)
    footprint = 2 * (w_bytes + bias_bytes) + io_bytes + act_bytes
    # Clamp to v7x-safe 64 MiB; floor at the 32 MiB default.
    vmem_limit = int(min(64 * 1024 * 1024, max(32 * 1024 * 1024, int(footprint * 1.5))))
    # NOTE: if H is large enough that W2 alone exceeds ~32 MiB, the all-resident
    # weight layout must be replaced by a K-tiled ("arbitrary") grid over H on v7x.

    cost = pl.CostEstimate(
        flops=2 * Bp * (D * H + H * H + H * two_z_p),
        transcendentals=2 * Bp * two_z_p,            # exp + log1p in softplus
        bytes_accessed=int(
            Yp.size * Yp.dtype.itemsize
            + w_bytes + bias_bytes
            + Bp * two_z_p * 4
        ),
    )

    out = pl.pallas_call(
        _make_kernel(z_dim),
        out_shape=jax.ShapeDtypeStruct((Bp, two_z_p), jnp.float32),
        grid=grid,
        in_specs=[
            pl.BlockSpec((TB, D), lambda i: (i, 0)),            # Y tile
            pl.BlockSpec((D, H), lambda i: (0, 0)),             # W1 (VMEM-resident)
            pl.BlockSpec((H, H), lambda i: (0, 0)),             # W2 (VMEM-resident)
            pl.BlockSpec((H, two_z_p), lambda i: (0, 0)),       # W3 padded (resident)
            pl.BlockSpec((3, maxW), lambda i: (0, 0)),          # packed biases
        ],
        out_specs=pl.BlockSpec((TB, two_z_p), lambda i: (i, 0)),
        compiler_params=pltpu.CompilerParams(
            dimension_semantics=("parallel",),
            vmem_limit_bytes=vmem_limit,
        ),
        cost_estimate=cost,
    )(Yp, W1, W2, W3p, b_packed)

    out = out[:B]
    mu = out[:, :z_dim]
    sigma = out[:, z_dim:two_z]
    return mu, sigma


def init_params(key, data_dim, hidden_dim, z_dim, dtype=jnp.bfloat16):
    """Synthetic init matching nn.Linear shapes; weights stored [in, out].

    bf16 weights are the default (MXU-native: ~3-4x f32 throughput and half
    the weight DMA bytes). Biases stay f32 (epilogue is f32)."""
    k1, k2, k3, k4, k5, k6 = jax.random.split(key, 6)
    scale = 0.1
    return {
        "W1": (scale * jax.random.normal(k1, (data_dim, hidden_dim), jnp.float32)).astype(dtype),
        "b1": scale * jax.random.normal(k2, (1, hidden_dim), jnp.float32),
        "W2": (scale * jax.random.normal(k3, (hidden_dim, hidden_dim), jnp.float32)).astype(dtype),
        "b2": scale * jax.random.normal(k4, (1, hidden_dim), jnp.float32),
        "W3": (scale * jax.random.normal(k5, (hidden_dim, 2 * z_dim), jnp.float32)).astype(dtype),
        "b3": scale * jax.random.normal(k6, (1, 2 * z_dim), jnp.float32),
    }


def _reference(Y, params):
    """Pure-JAX reference mirroring the kernel's numerics (casts activations
    to the weight dtype between layers, f32 accumulation)."""
    wdt = params["W1"].dtype
    x = Y.astype(wdt)
    h1 = jnp.dot(x, params["W1"], preferred_element_type=jnp.float32) + params["b1"]
    h1 = jnp.maximum(h1, 0.0).astype(wdt)
    h2 = jnp.dot(h1, params["W2"], preferred_element_type=jnp.float32) + params["b2"]
    h2 = jnp.maximum(h2, 0.0).astype(wdt)
    out = jnp.dot(h2, params["W3"], preferred_element_type=jnp.float32) + params["b3"]
    z = params["W3"].shape[1] // 2
    mu = out[:, :z]
    sigma = 1e-6 + jax.nn.softplus(out[:, z:2 * z])
    return mu, sigma


if __name__ == "__main__":
    # Small shapes consistent with the module:
    #   encoder_idx has length data_dim; hidden_dim; z_dim.
    B, data_dim, hidden_dim, z_dim = 8, 16, 32, 8

    key = jax.random.PRNGKey(0)
    k_y, k_p = jax.random.split(key)
    Y = jax.random.normal(k_y, (B, data_dim), jnp.float32)

    # --- Default path: bf16 weights (MXU-native), looser tolerance. ---
    params_bf16 = init_params(k_p, data_dim, hidden_dim, z_dim, dtype=jnp.bfloat16)
    fwd = jax.jit(functools.partial(encoder_forward, block_b=512))
    mu, sigma = fwd(Y, params_bf16)
    jax.block_until_ready((mu, sigma))
    mu_ref, sigma_ref = _reference(Y, params_bf16)
    assert mu.shape == (B, z_dim) and sigma.shape == (B, z_dim)
    assert jnp.allclose(mu, mu_ref, atol=3e-2, rtol=3e-2)
    assert jnp.allclose(sigma, sigma_ref, atol=3e-2, rtol=3e-2)
    assert bool(jnp.all(sigma > 0))

    # --- f32-weight path (tighter tolerance). ---
    params_f32 = init_params(k_p, data_dim, hidden_dim, z_dim, dtype=jnp.float32)
    mu_f, sigma_f = encoder_forward(Y, params_f32, block_b=512)
    jax.block_until_ready((mu_f, sigma_f))
    mu_fr, sigma_fr = _reference(Y, params_f32)
    assert jnp.allclose(mu_f, mu_fr, atol=1e-2, rtol=1e-2)
    assert jnp.allclose(sigma_f, sigma_fr, atol=1e-2, rtol=1e-2)

    # --- Gridded path: multiple batch tiles + batch padding (bf16). ---
    B2 = 600
    Y2 = jax.random.normal(jax.random.PRNGKey(1), (B2, data_dim), jnp.float32)
    mu2, sigma2 = encoder_forward(Y2, params_bf16, block_b=256)
    jax.block_until_ready((mu2, sigma2))
    mu2_ref, sigma2_ref = _reference(Y2, params_bf16)
    assert mu2.shape == (B2, z_dim) and sigma2.shape == (B2, z_dim)
    assert jnp.allclose(mu2, mu2_ref, atol=3e-2, rtol=3e-2)
    assert jnp.allclose(sigma2, sigma2_ref, atol=3e-2, rtol=3e-2)

    print("KERNEL_OK")
</pallas_src>

<mosaic_0001>
module attributes {stable_mosaic.version = 11 : i64} {
  func.func @kernel(%arg0: i32, %arg1: memref<8x16xf32, #tpu.memory_space<vmem>>, %arg2: memref<16x32xbf16, #tpu.memory_space<vmem>>, %arg3: memref<32x32xbf16, #tpu.memory_space<vmem>>, %arg4: memref<32x128xbf16, #tpu.memory_space<vmem>>, %arg5: memref<3x128xf32, #tpu.memory_space<vmem>>, %arg6: memref<8x128xf32, #tpu.memory_space<vmem>>) attributes {dimension_semantics = [#tpu.dimension_semantics<parallel>], iteration_bounds = array<i64: 1>, scalar_prefetch = 0 : i64, scratch_operands = 0 : i64, tpu.core_type = #tpu.core_type<tc>, window_params = [{transform_indices = @transform_0, window_bounds = array<i64: 8, 16>}, {pipeline_mode = #tpu.pipeline_mode<synchronous>, transform_indices = @transform_1, window_bounds = array<i64: 16, 32>}, {pipeline_mode = #tpu.pipeline_mode<synchronous>, transform_indices = @transform_2, window_bounds = array<i64: 32, 32>}, {pipeline_mode = #tpu.pipeline_mode<synchronous>, transform_indices = @transform_3, window_bounds = array<i64: 32, 128>}, {pipeline_mode = #tpu.pipeline_mode<synchronous>, transform_indices = @transform_4, window_bounds = array<i64: 3, 128>}, {transform_indices = @transform_5, window_bounds = array<i64: 8, 128>}]} {
    %c0 = arith.constant 0 : index
    %c0_0 = arith.constant 0 : index
    %0 = vector.load %arg1[%c0, %c0_0] : memref<8x16xf32, #tpu.memory_space<vmem>>, vector<8x16xf32>
    %1 = arith.truncf %0 : vector<8x16xf32> to vector<8x16xbf16>
    %c0_1 = arith.constant 0 : index
    %c0_2 = arith.constant 0 : index
    %2 = vector.load %arg5[%c0_1, %c0_2] : memref<3x128xf32, #tpu.memory_space<vmem>>, vector<1x32xf32>
    %c1 = arith.constant 1 : index
    %c0_3 = arith.constant 0 : index
    %3 = vector.load %arg5[%c1, %c0_3] : memref<3x128xf32, #tpu.memory_space<vmem>>, vector<1x32xf32>
    %c2 = arith.constant 2 : index
    %c0_4 = arith.constant 0 : index
    %4 = vector.load %arg5[%c2, %c0_4] : memref<3x128xf32, #tpu.memory_space<vmem>>, vector<1x128xf32>
    %c0_5 = arith.constant 0 : index
    %c0_6 = arith.constant 0 : index
    %5 = vector.load %arg2[%c0_5, %c0_6] : memref<16x32xbf16, #tpu.memory_space<vmem>>, vector<16x32xbf16>
    %cst = arith.constant dense<0.000000e+00> : vector<8x32xf32>
    %6 = tpu.matmul %1, %5, %cst {dimension_numbers = #tpu.dot_dimension_numbers<[1], [0], [0], [1], [0, 0, 1, 1], [], []>} : vector<8x16xbf16>, vector<16x32xbf16>, vector<8x32xf32> -> vector<8x32xf32>
    %7 = vector.broadcast %2 : vector<1x32xf32> to vector<8x32xf32>
    %8 = arith.addf %6, %7 : vector<8x32xf32>
    %cst_7 = arith.constant 0.000000e+00 : f32
    %9 = vector.broadcast %cst_7 : f32 to vector<8x32xf32>
    %10 = arith.maximumf %8, %9 : vector<8x32xf32>
    %11 = arith.truncf %10 : vector<8x32xf32> to vector<8x32xbf16>
    %c0_8 = arith.constant 0 : index
    %c0_9 = arith.constant 0 : index
    %12 = vector.load %arg3[%c0_8, %c0_9] : memref<32x32xbf16, #tpu.memory_space<vmem>>, vector<32x32xbf16>
    %cst_10 = arith.constant dense<0.000000e+00> : vector<8x32xf32>
    %13 = tpu.matmul %11, %12, %cst_10 {dimension_numbers = #tpu.dot_dimension_numbers<[1], [0], [0], [1], [0, 0, 1, 1], [], []>} : vector<8x32xbf16>, vector<32x32xbf16>, vector<8x32xf32> -> vector<8x32xf32>
    %14 = vector.broadcast %3 : vector<1x32xf32> to vector<8x32xf32>
    %15 = arith.addf %13, %14 : vector<8x32xf32>
    %cst_11 = arith.constant 0.000000e+00 : f32
    %16 = vector.broadcast %cst_11 : f32 to vector<8x32xf32>
    %17 = arith.maximumf %15, %16 : vector<8x32xf32>
    %18 = arith.truncf %17 : vector<8x32xf32> to vector<8x32xbf16>
    %c0_12 = arith.constant 0 : index
    %c0_13 = arith.constant 0 : index
    %19 = vector.load %arg4[%c0_12, %c0_13] : memref<32x128xbf16, #tpu.memory_space<vmem>>, vector<32x128xbf16>
    %cst_14 = arith.constant dense<0.000000e+00> : vector<8x128xf32>
    %20 = tpu.matmul %18, %19, %cst_14 {dimension_numbers = #tpu.dot_dimension_numbers<[1], [0], [0], [1], [0, 0, 1, 1], [], []>} : vector<8x32xbf16>, vector<32x128xbf16>, vector<8x128xf32> -> vector<8x128xf32>
    %21 = vector.broadcast %4 : vector<1x128xf32> to vector<8x128xf32>
    %22 = arith.addf %20, %21 : vector<8x128xf32>
    %cst_15 = arith.constant 0.000000e+00 : f32
    %23 = vector.broadcast %cst_15 : f32 to vector<8x128xf32>
    %24 = arith.maximumf %22, %23 : vector<8x128xf32>
    %25 = math.absf %22 : vector<8x128xf32>
    %cst_16 = arith.constant 0.000000e+00 : f32
    %26 = vector.broadcast %cst_16 : f32 to vector<8x128xf32>
    %27 = arith.subf %26, %25 : vector<8x128xf32>
    %28 = math.exp %27 : vector<8x128xf32>
    %29 = math.log1p %28 : vector<8x128xf32>
    %30 = arith.addf %24, %29 : vector<8x128xf32>
    %31 = tpu.iota {dimensions = array<i32: 1>} : vector<8x128xi32>
    %c8_i32 = arith.constant 8 : i32
    %32 = vector.broadcast %c8_i32 : i32 to vector<8x128xi32>
    %33 = arith.cmpi slt, %31, %32 : vector<8x128xi32>
    %cst_17 = arith.constant 9.99999997E-7 : f32
    %34 = vector.broadcast %cst_17 : f32 to vector<8x128xf32>
    %35 = arith.addf %34, %30 : vector<8x128xf32>
    %36 = arith.select %33, %22, %35 : vector<8x128xi1>, vector<8x128xf32>
    %c0_18 = arith.constant 0 : index
    %c0_19 = arith.constant 0 : index
    %37 = vector.load %arg6[%c0_18, %c0_19] : memref<8x128xf32, #tpu.memory_space<vmem>>, vector<8x128xf32>
    tpu.vector_store %arg6[%c0_18, %c0_19], %36 {strides = array<i32>} : memref<8x128xf32, #tpu.memory_space<vmem>>, vector<8x128xf32>,
    return
  }
  func.func @transform_0(%arg0: i32) -> (i32, i32) {
    %c0_i32 = arith.constant 0 : i32
    %c0_i32_0 = arith.constant 0 : i32
    return %arg0, %c0_i32 : i32, i32
  }
  func.func @transform_1(%arg0: i32) -> (i32, i32) {
    %c0_i32 = arith.constant 0 : i32
    %c0_i32_0 = arith.constant 0 : i32
    %c0_i32_1 = arith.constant 0 : i32
    return %c0_i32, %c0_i32_0 : i32, i32
  }
  func.func @transform_2(%arg0: i32) -> (i32, i32) {
    %c0_i32 = arith.constant 0 : i32
    %c0_i32_0 = arith.constant 0 : i32
    %c0_i32_1 = arith.constant 0 : i32
    return %c0_i32, %c0_i32_0 : i32, i32
  }
  func.func @transform_3(%arg0: i32) -> (i32, i32) {
    %c0_i32 = arith.constant 0 : i32
    %c0_i32_0 = arith.constant 0 : i32
    %c0_i32_1 = arith.constant 0 : i32
    return %c0_i32, %c0_i32_0 : i32, i32
  }
  func.func @transform_4(%arg0: i32) -> (i32, i32) {
    %c0_i32 = arith.constant 0 : i32
    %c0_i32_0 = arith.constant 0 : i32
    %c0_i32_1 = arith.constant 0 : i32
    return %c0_i32, %c0_i32_0 : i32, i32
  }
  func.func @transform_5(%arg0: i32) -> (i32, i32) {
    %c0_i32 = arith.constant 0 : i32
    %c0_i32_0 = arith.constant 0 : i32
    return %arg0, %c0_i32 : i32, i32
  }
}

</mosaic_0001>

<llo_original>
// kernel: encoder_forward.1
$region0: #{encoder_forward.1}
  #allocation0 [shape = 'u32[]', space=smem, size = 0x4, offset = 0x4, fixed_abs, tag = 'smem constant byte address 0x4 - core index']
  #allocation1 [shape = 'u32[144,128]{1,0:T(1,128)}', space=vmem, size = 0x12000, scoped, tag = 'internal scratch']
  %s0 = inlined_call_operand.vmem [shape: f32[8,16], index: 0, kind: input, shape index: {}]
  %s1 = inlined_call_operand.vmem [shape: bf16[16,32], index: 1, kind: input, shape index: {}]
  %s2 = inlined_call_operand.vmem [shape: bf16[32,32], index: 2, kind: input, shape index: {}]
  %s3 = inlined_call_operand.vmem [shape: bf16[32,128], index: 3, kind: input, shape index: {}]
  %s4 = inlined_call_operand.vmem [shape: f32[3,128], index: 4, kind: input, shape index: {}]
  %s5 = inlined_call_operand.vmem [shape: f32[8,128], index: 5, kind: output, shape index: {}]
  %s6 = sld [smem:[#allocation0]]
  $region30: #{encoder_forward.1} parent=0
    _
  %s8 = ssub.s32 1, %s6
  %s9 = scalar_select 0, %s8, %s6
  // Predicated region
  $region2: #{encoder_forward.1} parent=0 // pred_check
    _
  $region3: #{encoder_forward.1} parent=0 // pred_check_branch
    %11 = sbr.rel (0) target = $region5
  $region4: #{encoder_forward.1} parent=0 // pred_region
    _
  $region5: #{encoder_forward.1} parent=0 // pred_fallthru
    _
  // Predicated region
  $region6: #{encoder_forward.1} parent=0 // pred_check
    _
  $region7: #{encoder_forward.1} parent=0 // pred_check_branch
    %13 = sbr.rel (0) target = $region9
  $region8: #{encoder_forward.1} parent=0 // pred_region
    _
  $region9: #{encoder_forward.1} parent=0 // pred_fallthru
    _
  // Predicated region
  $region10: #{encoder_forward.1} parent=0 // pred_check
    _
  $region11: #{encoder_forward.1} parent=0 // pred_check_branch
    %15 = sbr.rel (0) target = $region13
  $region12: #{encoder_forward.1} parent=0 // pred_region
    _
  $region13: #{encoder_forward.1} parent=0 // pred_fallthru
    _
  // Predicated region
  $region14: #{encoder_forward.1} parent=0 // pred_check
    _
  $region15: #{encoder_forward.1} parent=0 // pred_check_branch
    %17 = sbr.rel (0) target = $region17
  $region16: #{encoder_forward.1} parent=0 // pred_region
    _
  $region17: #{encoder_forward.1} parent=0 // pred_fallthru
    _
  // Predicated region
  $region18: #{encoder_forward.1} parent=0 // pred_check
    _
  $region19: #{encoder_forward.1} parent=0 // pred_check_branch
    %19 = sbr.rel (0) target = $region21
  $region20: #{encoder_forward.1} parent=0 // pred_region
    _
  $region21: #{encoder_forward.1} parent=0 // pred_fallthru
    _
  %v21 = vld [vmem:[%s0] sm:$0xff]
  %v22 = vpack.c.bf16 %v21, %v21
  %v23 = vld [vmem:[%s4] sm:$0x1]
  %v24 = vld [vmem:[%s4 + $0x1] sm:$0x1]
  %v25 = vld [vmem:[%s4 + $0x2] sm:$0x1]
  %v26 = vld [vmem:[%s1] sm:$0xf]
  %v27 = vld [vmem:[%s1 + $0x4] sm:$0xf]
  %v28 = vlaneseq
  %v29 = vshrl.u32 %v28, 7
  %v30 = vsub.s32 0, %v29
  %v31 = vrot.slane %v23, %v30
  %v34 = vunpack.c.l.b16 %v26
  %v35 = vunpack.c.l.b16 %v27
  %v36 = vpack.c.b16 %v35, %v34
  %vm38 = vcmask 130048
  %v40 = vsel %vm38, %v22, 0
  %42 = vmatprep.subr.bf16.mxu0 0
  %43 = vmatpush1.bf16.msra.mxu0 0
  %44 = vmatprep.subr.bf16.mxu0 0
  %45 = vmatpush1.bf16.msra.mxu0 0
  %46 = vmatprep.subr.bf16.mxu0 0
  %47 = vmatpush1.bf16.msra.mxu0 0
  %48 = vmatprep.subr.bf16.mxu0 0
  %49 = vmatpush1.bf16.msra.mxu0 0
  %50 = vmatprep.subr.bf16.mxu0 0
  %51 = vmatpush1.bf16.msra.mxu0 0
  %52 = vmatprep.subr.bf16.mxu0 0
  %53 = vmatpush1.bf16.msra.mxu0 0
  %54 = vmatprep.subr.bf16.mxu0 0
  %55 = vmatpush1.bf16.msra.mxu0 0
  %56 = vmatprep.subr.bf16.mxu0 0
  %57 = vmatpush1.bf16.msra.mxu0 %v36
  %58 = vmatprep.subr.bf16.mxu0 0
  %59 = vmatpush2.bf16.msra.mxu0 0
  %60 = vmatprep.subr.bf16.mxu0 0
  %61 = vmatpush2.bf16.msra.mxu0 0
  %62 = vmatprep.subr.bf16.mxu0 0
  %63 = vmatpush2.bf16.msra.mxu0 0
  %64 = vmatprep.subr.bf16.mxu0 0
  %65 = vmatpush2.bf16.msra.mxu0 0
  %66 = vmatprep.subr.bf16.mxu0 0
  %67 = vmatpush2.bf16.msra.mxu0 0
  %68 = vmatprep.subr.bf16.mxu0 0
  %69 = vmatpush2.bf16.msra.mxu0 0
  %70 = vmatprep.subr.bf16.mxu0 0
  %71 = vmatpush2.bf16.msra.mxu0 0
  %72 = vmatprep.subr.bf16.mxu0 0
  %73 = vmatpush2.bf16.msra.mxu0 0
  %74 = vmatprep.mubr.bf16.mxu0 0
  %75 = vmatmul.mubr.bf16.gmra.mxu0 %v40
  %v76 = vpop.f32.mrf.mxu0
  %v77 = vadd.f32 %v31, %v76
  %v78 = vpop.f32.mrf.mxu0
  %v79 = vpop.f32.mrf.mxu0
  %v80 = vpop.f32.mrf.mxu0
  %81 = vdwg.mxu0
  %v82 = vmax.f32 %v77, 0.0
  %v83 = vpack.c.bf16 %v82, %v82
  %v84 = vld [vmem:[%s2] sm:$0xf]
  %v85 = vld [vmem:[%s2 + $0x4] sm:$0xf]
  %v86 = vld [vmem:[%s2 + $0x8] sm:$0xf]
  %v87 = vld [vmem:[%s2 + $0xc] sm:$0xf]
  %v88 = vlaneseq
  %v89 = vshrl.u32 %v88, 7
  %v90 = vsub.s32 0, %v89
  %v91 = vrot.slane %v24, %v90
  %v96 = vunpack.c.l.b16 %v84
  %v97 = vunpack.c.l.b16 %v85
  %v98 = vunpack.c.l.b16 %v86
  %v99 = vunpack.c.l.b16 %v87
  %v100 = vpack.c.b16 %v97, %v96
  %v101 = vpack.c.b16 %v99, %v98
  %vm104 = vcmask 261120
  %v106 = vsel %vm104, %v83, 0
  %108 = vmatprep.subr.bf16.mxu0 0
  %109 = vmatpush1.bf16.msra.mxu0 0
  %110 = vmatprep.subr.bf16.mxu0 0
  %111 = vmatpush1.bf16.msra.mxu0 0
  %112 = vmatprep.subr.bf16.mxu0 0
  %113 = vmatpush1.bf16.msra.mxu0 0
  %114 = vmatprep.subr.bf16.mxu0 0
  %115 = vmatpush1.bf16.msra.mxu0 0
  %116 = vmatprep.subr.bf16.mxu0 0
  %117 = vmatpush1.bf16.msra.mxu0 0
  %118 = vmatprep.subr.bf16.mxu0 0
  %119 = vmatpush1.bf16.msra.mxu0 0
  %120 = vmatprep.subr.bf16.mxu0 0
  %121 = vmatpush1.bf16.msra.mxu0 %v101
  %122 = vmatprep.subr.bf16.mxu0 0
  %123 = vmatpush1.bf16.msra.mxu0 %v100
  %124 = vmatprep.subr.bf16.mxu0 0
  %125 = vmatpush2.bf16.msra.mxu0 0
  %126 = vmatprep.subr.bf16.mxu0 0
  %127 = vmatpush2.bf16.msra.mxu0 0
  %128 = vmatprep.subr.bf16.mxu0 0
  %129 = vmatpush2.bf16.msra.mxu0 0
  %130 = vmatprep.subr.bf16.mxu0 0
  %131 = vmatpush2.bf16.msra.mxu0 0
  %132 = vmatprep.subr.bf16.mxu0 0
  %133 = vmatpush2.bf16.msra.mxu0 0
  %134 = vmatprep.subr.bf16.mxu0 0
  %135 = vmatpush2.bf16.msra.mxu0 0
  %136 = vmatprep.subr.bf16.mxu0 0
  %137 = vmatpush2.bf16.msra.mxu0 0
  %138 = vmatprep.subr.bf16.mxu0 0
  %139 = vmatpush2.bf16.msra.mxu0 0
  %140 = vmatprep.mubr.bf16.mxu0 0
  %141 = vmatmul.mubr.bf16.gmra.mxu0 %v106
  %v142 = vpop.f32.mrf.mxu0
  %v143 = vadd.f32 %v91, %v142
  %v144 = vpop.f32.mrf.mxu0
  %v145 = vpop.f32.mrf.mxu0
  %v146 = vpop.f32.mrf.mxu0
  %147 = vdwg.mxu0
  %v148 = vmax.f32 %v143, 0.0
  %v149 = vpack.c.bf16 %v148, %v148
  %v150 = vld [vmem:[%s3] sm:$0xf]
  %v151 = vld [vmem:[%s3 + $0x4] sm:$0xf]
  %v152 = vld [vmem:[%s3 + $0x8] sm:$0xf]
  %v153 = vld [vmem:[%s3 + $0xc] sm:$0xf]
  %v154 = vlaneseq
  %v155 = vshrl.u32 %v154, 7
  %v156 = vsub.s32 0, %v155
  %v157 = vrot.slane %v25, %v156
  %v162 = vunpack.c.l.b16 %v150
  %v163 = vunpack.c.l.b16 %v151
  %v164 = vunpack.c.l.b16 %v152
  %v165 = vunpack.c.l.b16 %v153
  %v166 = vpack.c.b16 %v163, %v162
  %v167 = vpack.c.b16 %v165, %v164
  %v171 = vsel %vm104, %v149, 0
  %173 = vmatprep.subr.bf16.mxu0 0
  %174 = vmatpush1.bf16.msra.mxu0 0
  %175 = vmatprep.subr.bf16.mxu0 0
  %176 = vmatpush1.bf16.msra.mxu0 0
  %177 = vmatprep.subr.bf16.mxu0 0
  %178 = vmatpush1.bf16.msra.mxu0 0
  %179 = vmatprep.subr.bf16.mxu0 0
  %180 = vmatpush1.bf16.msra.mxu0 0
  %181 = vmatprep.subr.bf16.mxu0 0
  %182 = vmatpush1.bf16.msra.mxu0 0
  %183 = vmatprep.subr.bf16.mxu0 0
  %184 = vmatpush1.bf16.msra.mxu0 0
  %185 = vmatprep.subr.bf16.mxu0 0
  %186 = vmatpush1.bf16.msra.mxu0 %v167
  %187 = vmatprep.subr.bf16.mxu0 0
  %188 = vmatpush1.bf16.msra.mxu0 %v166
  %189 = vmatprep.subr.bf16.mxu0 0
  %190 = vmatpush2.bf16.msra.mxu0 0
  %191 = vmatprep.subr.bf16.mxu0 0
  %192 = vmatpush2.bf16.msra.mxu0 0
  %193 = vmatprep.subr.bf16.mxu0 0
  %194 = vmatpush2.bf16.msra.mxu0 0
  %195 = vmatprep.subr.bf16.mxu0 0
  %196 = vmatpush2.bf16.msra.mxu0 0
  %197 = vmatprep.subr.bf16.mxu0 0
  %198 = vmatpush2.bf16.msra.mxu0 0
  %199 = vmatprep.subr.bf16.mxu0 0
  %200 = vmatpush2.bf16.msra.mxu0 0
  %201 = vmatprep.subr.bf16.mxu0 0
  %202 = vmatpush2.bf16.msra.mxu0 0
  %203 = vmatprep.subr.bf16.mxu0 0
  %204 = vmatpush2.bf16.msra.mxu0 0
  %205 = vmatprep.mubr.bf16.mxu0 0
  %206 = vmatmul.mubr.bf16.gmra.mxu0 %v171
  %v207 = vpop.f32.mrf.mxu0
  %v208 = vadd.f32 %v157, %v207
  %v209 = vpop.f32.mrf.mxu0
  %v210 = vpop.f32.mrf.mxu0
  %v211 = vpop.f32.mrf.mxu0
  %212 = vdwg.mxu0
  %v213 = vmax.f32 %v208, 0.0
  %v214 = vand.u32 2147483647, %v208
  %v215 = vsub.f32 0.0, %v214
  %v216 = vmul.f32 %v215, 1.442695
  %v217 = vpow.pop %v216
  %v218 = vadd.f32 %v217, 1.0
  %v219 = vlog2.pop %v218
  %v220 = vmul.f32 %v219, 0.6931472
  %v221 = vmul.f32 -0.5, %v217
  %v222 = vadd.f32 %v221, 1.0
  %v223 = vmul.f32 %v222, %v217
  %v224 = vand.u32 2147483647, %v217
  %vm225 = vcmp.lt.f32.partialorder %v224, 0.0004427343
  %v226 = vsel %vm225, %v223, %v220
  %v227 = vadd.f32 %v213, %v226
  %v228 = vlaneseq
  %v229 = vand.u32 %v228, 127
  %vm230 = vcmp.lt.s32.totalorder %v229, 8
  %v231 = vadd.f32 %v227, 1e-06
  %v232 = vsel %vm230, %v208, %v231
  %233 = vst [vmem:[%s5] sm:$0xff] %v232
  // Predicated region
  $region22: #{encoder_forward.1} parent=0 // pred_check
    _
  $region23: #{encoder_forward.1} parent=0 // pred_check_branch
    %235 = sbr.rel (0) target = $region25
  $region24: #{encoder_forward.1} parent=0 // pred_region
    _
  $region25: #{encoder_forward.1} parent=0 // pred_fallthru
    _
  // Predicated region
  $region26: #{encoder_forward.1} parent=0 // pred_check
    _
  $region27: #{encoder_forward.1} parent=0 // pred_check_branch
    %237 = sbr.rel (0) target = $region29
  $region28: #{encoder_forward.1} parent=0 // pred_region
    _
  $region29: #{encoder_forward.1} parent=0 // pred_fallthru
    _

</llo_original>
